<compile_context>
chip_gen: v6e
topology: v6e:2x2x1
jax: 0.10.0
libtpu: 0.0.40
codegen_flags: <defaults>
</compile_context>

<pallas_src>
import jax
import jax.numpy as jnp
from jax.experimental import pallas as pl
from jax.experimental.pallas import tpu as pltpu

_VMEM = pltpu.MemorySpace.VMEM


def _round_up(x, m):
    return ((x + m - 1) // m) * m


def _vmem_limit(nbytes):
    # Explicit scoped-VMEM limit sized to the actual buffers (2x headroom), floored at 32 MiB.
    return int(min(max(2 * nbytes + (2 << 20), 32 << 20), 100 << 20))


# --------------------------- fused GraphEncoder kernel ---------------------------

def gcn_stack(feats, edge_src, edge_dst, edge_w, gcn_params):
    """All GraphConv(norm='both', edge_weight)+tanh layers plus the post-concat ReLU, fused.

    feats: (N, F0) f32 node features of the batched subgraph.
    Returns (N, sum(out_feats)) f32 == relu(cat_l tanh(GraphConv_l(...))).
    """
    n, f0 = feats.shape
    num_layers = len(gcn_params)
    out_feats = [int(w.shape[1]) for (w, _) in gcn_params]
    fmax = _round_up(max([f0] + out_feats), 8)

    # Node tile: biggest of 512/256/128 that does not grossly over-pad tiny graphs.
    npad128 = _round_up(n, 128)
    tile = 128
    for cand in (512, 256):
        if npad128 >= cand:
            tile = cand
            break
    n_pad = _round_up(n, tile)
    tm = tk = tile
    ni = nk = n_pad // tile

    # ---- padded / transposed operands (glue) ----
    # A^T (unnormalized, edge-weighted), cast to bf16: halves HBM bytes of the dominant read.
    adj_t = jnp.zeros((n_pad, n_pad), jnp.float32).at[edge_src, edge_dst].add(edge_w)
    adj_t = adj_t.astype(jnp.bfloat16)
    # DGL GraphConv(norm='both') uses *unweighted* degrees, clamped to >= 1; the normalization
    # itself is applied inside the kernel (no normalized N x N copy is ever materialized).
    out_deg = jnp.maximum(jnp.zeros((n_pad,), jnp.float32).at[edge_src].add(1.0), 1.0)
    in_deg = jnp.maximum(jnp.zeros((n_pad,), jnp.float32).at[edge_dst].add(1.0), 1.0)
    rs_out = (out_deg ** -0.5).reshape(1, n_pad)   # source-side norm
    rs_in = (in_deg ** -0.5).reshape(1, n_pad)     # dest-side norm

    x0_t = jnp.zeros((fmax, n_pad), jnp.float32).at[:f0, :n].set(feats.T)

    # Stacked, zero-padded W^T / bias so one index_map selects the layer's weights.
    w_t = jnp.zeros((num_layers, fmax, fmax), jnp.float32)
    b_t = jnp.zeros((num_layers, fmax, 1), jnp.float32)
    for l, (w, b) in enumerate(gcn_params):
        w_t = w_t.at[l, : w.shape[1], : w.shape[0]].set(w.T)
        b_t = b_t.at[l, : b.shape[0], 0].set(b)

    def kernel(x0_ref, adjt_ref, rsi_ref, rso_ref, wt_ref, b_ref, o_ref,
               h_a, h_b, acc_ref):
        l = pl.program_id(0)
        i = pl.program_id(1)
        k = pl.program_id(2)
        nk_ = pl.num_programs(2)
        parity = l % 2

        @pl.when(k == 0)
        def _init():
            acc_ref[...] = jnp.zeros_like(acc_ref)

        # Previous-layer activations for this source-node block (VMEM ping-pong carry);
        # the first layer reads the padded/transposed input features instead.
        kcol = pl.multiple_of(k * tk, tk)
        h_prev = jnp.where(
            l == 0,
            x0_ref[...],
            jnp.where(parity == 1, h_a[:, pl.ds(kcol, tk)], h_b[:, pl.ds(kcol, tk)]),
        )

        # (h W_l)^T for this block, scaled by out-degree^-1/2 of the source nodes.
        xw_t = jnp.dot(wt_ref[0], h_prev, preferred_element_type=jnp.float32)
        xw_t = xw_t * rso_ref[...]
        # Aggregate over this source block: bf16 MXU feed, f32 accumulation.
        acc_ref[...] += jnp.dot(xw_t.astype(jnp.bfloat16), adjt_ref[...],
                                preferred_element_type=jnp.float32)

        @pl.when(k == nk_ - 1)
        def _finalize():
            y = jnp.tanh(acc_ref[...] * rsi_ref[...] + b_ref[0])
            # The ReLU that follows the GraphEncoder concat in the reference is fused here
            # (the *un-ReLU'd* tanh output feeds the next layer, matching the torch code).
            o_ref[0] = jnp.maximum(y, 0.0)
            icol = pl.multiple_of(i * tm, tm)

            @pl.when(parity == 0)
            def _():
                h_a[:, pl.ds(icol, tm)] = y

            @pl.when(parity == 1)
            def _():
                h_b[:, pl.ds(icol, tm)] = y

    est = (2 * (fmax * tk * 4 + tk * tm * 2 + tm * 4 + tk * 4
                + fmax * fmax * 4 + fmax * 4 + fmax * tm * 4)
           + 2 * fmax * n_pad * 4 + fmax * tm * 4)

    out = pl.pallas_call(
        kernel,
        out_shape=jax.ShapeDtypeStruct((num_layers, fmax, n_pad), jnp.float32),
        grid_spec=pltpu.PrefetchScalarGridSpec(
            num_scalar_prefetch=0,
            grid=(num_layers, ni, nk),
            in_specs=[
                pl.BlockSpec((fmax, tk), lambda l, i, k: (0, k)),          # X0^T
                pl.BlockSpec((tk, tm), lambda l, i, k: (k, i)),            # A^T tile (bf16)
                pl.BlockSpec((1, tm), lambda l, i, k: (0, i)),             # in-deg^-1/2 (dest)
                pl.BlockSpec((1, tk), lambda l, i, k: (0, k)),             # out-deg^-1/2 (src)
                pl.BlockSpec((1, fmax, fmax), lambda l, i, k: (l, 0, 0)),  # W_l^T (padded)
                pl.BlockSpec((1, fmax, 1), lambda l, i, k: (l, 0, 0)),     # b_l (padded)
            ],
            out_specs=pl.BlockSpec((1, fmax, tm), lambda l, i, k: (l, 0, i)),
            scratch_shapes=[
                pltpu.VMEM((fmax, n_pad), jnp.float32),   # activations, even layers
                pltpu.VMEM((fmax, n_pad), jnp.float32),   # activations, odd layers
                pltpu.VMEM((fmax, tm), jnp.float32),      # f32 accumulator
            ],
        ),
        compiler_params=pltpu.CompilerParams(
            # NOTE: the row-tile axis cannot be "parallel": layer l reads every row tile of
            # layer l-1 from the VMEM carry, so all rows must stay on one TensorCore.
            dimension_semantics=("arbitrary", "arbitrary", "arbitrary"),
            vmem_limit_bytes=_vmem_limit(est),
        ),
    )(x0_t, adj_t, rs_in, rs_out, w_t, b_t)

    # Drop padding and assemble the per-node concatenation (ReLU already applied in-kernel).
    return jnp.concatenate([out[l, :fo, :n].T for l, fo in enumerate(out_feats)], axis=-1)


# --------------------------- fused CNN + MLP kernel ---------------------------

def cnn_mlp(pooled, conv_layers, mlp_layers):
    """Fused Conv1d/eval-BN/ReLU stack (NCW) -> torch-order flatten -> MLP, one pallas_call.

    pooled: (B, L0) SortPooling output (the torch code unsqueezes it to (B, 1, L0)).
    conv_layers / mlp_layers: dicts with w, b, scale, shift, relu (eval-BN folded to scale/shift).
    """
    nb, l0 = pooled.shape

    conv_meta = []
    args = [pooled.reshape(1, nb * l0)]          # (Cin=1, B*L0), per-batch length segments
    cin, lin = 1, l0
    for layer in conv_layers:
        cout, _, kk = layer["w"].shape
        lout = lin - kk + 1
        assert lout >= 1, "conv kernel size exceeds input length"
        conv_meta.append((cin, cout, kk, lin, lout, layer["relu"]))
        # (Cout, Cin, K) -> (Cout, K*Cin), tap-major, matching the in-kernel im2col stacking.
        args.append(jnp.transpose(layer["w"], (0, 2, 1)).reshape(cout, kk * cin))
        args.append(layer["b"].reshape(cout, 1))
        args.append(layer["scale"].reshape(cout, 1))
        args.append(layer["shift"].reshape(cout, 1))
        cin, lin = cout, lout

    mlp_meta = []
    fin = cin * lin
    for layer in mlp_layers:
        assert layer["w"].shape[0] == fin
        fout = layer["w"].shape[1]
        mlp_meta.append((fin, fout, layer["relu"]))
        args.append(layer["w"])
        args.append(layer["b"].reshape(1, fout))
        args.append(layer["scale"].reshape(1, fout))
        args.append(layer["shift"].reshape(1, fout))
        fin = fout

    n_in = len(args)
    n_out_feats = mlp_meta[-1][1]
    c_last, l_last = conv_meta[-1][1], conv_meta[-1][4]

    def kernel(*refs):
        x = refs[0][...]                          # (Cin, B*L)
        p = 1
        for (ci, co, kk, li, lo, relu) in conv_meta:
            w2 = refs[p][...]
            bc = refs[p + 1][...]
            sc = refs[p + 2][...]
            sh = refs[p + 3][...]
            p += 4
            # im2col: one lane-dense dot (Cout, Cin*K) @ (Cin*K, B*Lout) replaces B*K tiny dots.
            taps = []
            for t in range(kk):
                taps.append(jnp.concatenate(
                    [x[:, bb * li + t: bb * li + t + lo] for bb in range(nb)], axis=1))
            patch = jnp.concatenate(taps, axis=0)
            y = jnp.dot(w2, patch, preferred_element_type=jnp.float32)
            y = (y + bc) * sc + sh
            if relu:
                y = jnp.maximum(y, 0.0)
            x = y
        # Flatten (C_last, B*L_last) -> (B, C_last*L_last) in torch's channel-major .view order.
        rows = []
        for bb in range(nb):
            rows.append(jnp.concatenate(
                [x[c:c + 1, bb * l_last:(bb + 1) * l_last] for c in range(c_last)], axis=1))
        x = jnp.concatenate(rows, axis=0)
        for (fi, fo, relu) in mlp_meta:
            w = refs[p][...]
            bl = refs[p + 1][...]
            sc = refs[p + 2][...]
            sh = refs[p + 3][...]
            p += 4
            y = jnp.dot(x, w, preferred_element_type=jnp.float32) + bl
            y = y * sc + sh
            if relu:
                y = jnp.maximum(y, 0.0)
            x = y
        refs[p][...] = x

    est = sum(int(a.size) * 4 for a in args) + nb * n_out_feats * 4 + (1 << 20)
    # TODO(synk): for very large mlp_in (huge k*D*Cout), the first MLP weight would need a
    # reduction-tiled grid instead of whole-array VMEM residency.
    return pl.pallas_call(
        kernel,
        out_shape=jax.ShapeDtypeStruct((nb, n_out_feats), jnp.float32),
        in_specs=[pl.BlockSpec(memory_space=_VMEM) for _ in range(n_in)],
        out_specs=pl.BlockSpec(memory_space=_VMEM),
        compiler_params=pltpu.CompilerParams(vmem_limit_bytes=_vmem_limit(est)),
    )(*args)


# ------------------------------ glue / model ------------------------------

def _bn_eval_scale_shift(gamma, beta, mean, var, eps=1e-5):
    scale = gamma / jnp.sqrt(var + eps)
    shift = beta - mean * scale
    return scale, shift


def init_params(key, cfg, n_full, attr_dim):
    m = cfg["model"]
    ki = iter(jax.random.split(key, 32))
    emb_dim = m["embedding_dim"]
    params = {"embedding": 0.1 * jax.random.normal(
        next(ki), (n_full + m["max_z"], emb_dim), jnp.float32)}

    # GraphEncoder params (DGL GraphConv: weight (in, out), bias (out,))
    gcn = []
    fin = attr_dim + 2 * emb_dim
    for fout in m["graph_conv"]["out_feats"]:
        w = 0.3 * jax.random.normal(next(ki), (fin, fout), jnp.float32)
        b = 0.1 * jax.random.normal(next(ki), (fout,), jnp.float32)
        gcn.append((w, b))
        fin = fout
    params["gcn"] = gcn

    # CNN params (Conv1d weight (Cout, Cin, K)) + eval BatchNorm stats
    cnn = []
    cin = 1
    for cout, kk in zip(m["convolutional"]["out_channels"],
                        m["convolutional"]["kernel_size"]):
        cnn.append({
            "w": 0.3 * jax.random.normal(next(ki), (cout, cin, kk), jnp.float32),
            "b": 0.1 * jax.random.normal(next(ki), (cout,), jnp.float32),
            "gamma": 1.0 + 0.1 * jax.random.normal(next(ki), (cout,), jnp.float32),
            "beta": 0.1 * jax.random.normal(next(ki), (cout,), jnp.float32),
            "mean": 0.1 * jax.random.normal(next(ki), (cout,), jnp.float32),
            "var": 0.5 + jax.random.uniform(next(ki), (cout,), jnp.float32),
        })
        cin = cout
    params["cnn"] = cnn

    # mlp_in_features exactly as computed in DGCNN.__init__
    mlp_in = sum(m["graph_conv"]["out_feats"]) * m["sort_pooling"]["k"]
    for kk in m["convolutional"]["kernel_size"]:
        mlp_in -= kk - 1
    mlp_in *= m["convolutional"]["out_channels"][-1]

    mlp = []
    fin = mlp_in
    for fout in m["linear"]["out_features"]:
        mlp.append({
            "w": 0.2 * jax.random.normal(next(ki), (fin, fout), jnp.float32),
            "b": 0.1 * jax.random.normal(next(ki), (fout,), jnp.float32),
            "gamma": 1.0 + 0.1 * jax.random.normal(next(ki), (fout,), jnp.float32),
            "beta": 0.1 * jax.random.normal(next(ki), (fout,), jnp.float32),
            "mean": 0.1 * jax.random.normal(next(ki), (fout,), jnp.float32),
            "var": 0.5 + jax.random.uniform(next(ki), (fout,), jnp.float32),
        })
        fin = fout
    params["mlp"] = mlp
    return params


def dgcnn_forward(params, cfg, node_attr, edge_weights_full,
                  node_id, node_labels, edge_src, edge_dst, edge_id,
                  num_graphs, nodes_per_graph):
    m = cfg["model"]
    n_full = node_attr.shape[0]

    # --- input node features: [attrs, node embedding, label embedding] ---
    emb = params["embedding"]
    feats = jnp.concatenate([node_attr[node_id],
                             emb[node_id],
                             emb[n_full + node_labels]], axis=1)

    # --- fused GraphEncoder (+ concat + ReLU); 'both' normalization applied in-kernel ---
    # TODO(synk): Dropout layers are identity in eval mode; not modeled for training.
    ew = edge_weights_full[edge_id]
    h = gcn_stack(feats, edge_src, edge_dst, ew, params["gcn"])

    # --- SortPooling(k) ---
    # TODO(synk): sorting has no clean Pallas/TPU primitive; done with jnp.sort/argsort in glue.
    k = m["sort_pooling"]["k"]
    d = h.shape[-1]
    h = h.reshape(num_graphs, nodes_per_graph, d)
    h = jnp.sort(h, axis=-1)                                 # per-node ascending feature sort
    order = jnp.argsort(-h[:, :, -1], axis=-1)[:, :k]        # top-k nodes by last feature
    h = jnp.take_along_axis(h, order[:, :, None], axis=1)    # (B, k, D)
    pooled = h.reshape(num_graphs, k * d)

    # --- fused CNN (+eval-BN+ReLU) -> flatten -> MLP (+eval-BN+ReLU) ---
    conv_layers = []
    cnn = params["cnn"]
    for i, layer in enumerate(cnn):
        last = (i == len(cnn) - 1)
        if last:  # last Conv1d has no BN/ReLU (cnn_layers[:-3])
            scale = jnp.ones((layer["w"].shape[0],), jnp.float32)
            shift = jnp.zeros((layer["w"].shape[0],), jnp.float32)
        else:
            scale, shift = _bn_eval_scale_shift(layer["gamma"], layer["beta"],
                                                layer["mean"], layer["var"])
        conv_layers.append({"w": layer["w"], "b": layer["b"],
                            "scale": scale, "shift": shift, "relu": not last})

    mlp_layers = []
    mlp = params["mlp"]
    for i, layer in enumerate(mlp):
        last = (i == len(mlp) - 1)
        if last:  # last Linear has no BN/ReLU (linear_layers[:-3])
            scale = jnp.ones((layer["w"].shape[1],), jnp.float32)
            shift = jnp.zeros((layer["w"].shape[1],), jnp.float32)
        else:
            scale, shift = _bn_eval_scale_shift(layer["gamma"], layer["beta"],
                                                layer["mean"], layer["var"])
        mlp_layers.append({"w": layer["w"], "b": layer["b"],
                           "scale": scale, "shift": shift, "relu": not last})

    return cnn_mlp(pooled, conv_layers, mlp_layers)


if __name__ == "__main__":
    out_feats = [4, 4]
    config = {
        "model": {
            "max_z": 5,
            "embedding_dim": 4,
            "graph_conv": {"out_feats": out_feats, "dropout": [0.0, 0.0]},
            "sort_pooling": {"k": 4},
            "convolutional": {"out_channels": [3, 5],
                              "kernel_size": [0, 3],
                              "cnn_dropout": [0.0, 0.0]},
            "linear": {"out_features": [16, 2], "dropout": [0.0, 0.0]},
        }
    }
    # DGCNN.__init__ overwrites the first conv kernel size:
    config["model"]["convolutional"]["kernel_size"][0] = len(out_feats) * out_feats[0] + 1
    # assertion from DGCNN.__init__
    assert len(set(config["model"]["graph_conv"]["out_feats"][:-1])) == \
           len(set(config["model"]["graph_conv"]["dropout"][:-1])) == 1

    key = jax.random.PRNGKey(0)
    k1, k2, k3, k4, k5 = jax.random.split(key, 5)

    n_full, attr_dim = 20, 3          # ndata: full-graph node attributes
    num_graphs, nodes_per_graph = 2, 8
    n_sub = num_graphs * nodes_per_graph

    node_attr = jax.random.normal(k1, (n_full, attr_dim), jnp.float32)
    n_full_edges = 64
    edge_weights_full = jax.random.uniform(k2, (n_full_edges,), jnp.float32, 0.5, 1.5)
    node_id = jax.random.randint(k3, (n_sub,), 0, n_full)
    node_labels = jax.random.randint(k4, (n_sub,), 0, config["model"]["max_z"])

    # batched subgraph: bidirectional ring per graph (block-diagonal, every node in-degree >= 1)
    src, dst = [], []
    for g in range(num_graphs):
        base = g * nodes_per_graph
        for i in range(nodes_per_graph):
            j = (i + 1) % nodes_per_graph
            src += [base + i, base + j]
            dst += [base + j, base + i]
    edge_src = jnp.array(src, jnp.int32)
    edge_dst = jnp.array(dst, jnp.int32)
    edge_id = jax.random.randint(k5, (edge_src.shape[0],), 0, n_full_edges)

    params = init_params(jax.random.PRNGKey(0), config, n_full, attr_dim)

    out = dgcnn_forward(params, config, node_attr, edge_weights_full,
                        node_id, node_labels, edge_src, edge_dst, edge_id,
                        num_graphs, nodes_per_graph)
    out = jax.block_until_ready(out)
    assert out.shape == (num_graphs, config["model"]["linear"]["out_features"][-1])
    assert bool(jnp.all(jnp.isfinite(out)))
    print("KERNEL_OK")
</pallas_src>

<mosaic_0001>
module attributes {stable_mosaic.version = 11 : i64} {
  func.func @kernel(%arg0: i32, %arg1: i32, %arg2: i32, %arg3: memref<16x128xf32, #tpu.memory_space<vmem>>, %arg4: memref<128x128xbf16, #tpu.memory_space<vmem>>, %arg5: memref<1x128xf32, #tpu.memory_space<vmem>>, %arg6: memref<1x128xf32, #tpu.memory_space<vmem>>, %arg7: memref<1x16x16xf32, #tpu.memory_space<vmem>>, %arg8: memref<1x16x1xf32, #tpu.memory_space<vmem>>, %arg9: memref<1x16x128xf32, #tpu.memory_space<vmem>>, %arg10: memref<16x128xf32, #tpu.memory_space<vmem>>, %arg11: memref<16x128xf32, #tpu.memory_space<vmem>>, %arg12: memref<16x128xf32, #tpu.memory_space<vmem>>) attributes {dimension_semantics = [#tpu.dimension_semantics<arbitrary>, #tpu.dimension_semantics<arbitrary>, #tpu.dimension_semantics<arbitrary>], iteration_bounds = array<i64: 2, 1, 1>, scalar_prefetch = 0 : i64, scratch_operands = 3 : i64, tpu.core_type = #tpu.core_type<tc>, window_params = [{transform_indices = @transform_0, window_bounds = array<i64: 16, 128>}, {transform_indices = @transform_1, window_bounds = array<i64: 128, 128>}, {transform_indices = @transform_2, window_bounds = array<i64: 1, 128>}, {transform_indices = @transform_3, window_bounds = array<i64: 1, 128>}, {transform_indices = @transform_4, window_bounds = array<i64: 1, 16, 16>}, {transform_indices = @transform_5, window_bounds = array<i64: 1, 16, 1>}, {transform_indices = @transform_6, window_bounds = array<i64: 1, 16, 128>}]} {
    %c2_i32 = arith.constant 2 : i32
    %c0_i32 = arith.constant 0 : i32
    %0 = arith.cmpi eq, %c2_i32, %c0_i32 : i32
    %c1_i32 = arith.constant 1 : i32
    %1 = arith.select %0, %c1_i32, %c2_i32 : i32
    %2 = arith.remsi %arg0, %1 : i32
    %c0_i32_0 = arith.constant 0 : i32
    %3 = arith.cmpi ne, %2, %c0_i32_0 : i32
    %c0_i32_1 = arith.constant 0 : i32
    %4 = arith.cmpi slt, %2, %c0_i32_1 : i32
    %c0_i32_2 = arith.constant 0 : i32
    %5 = arith.cmpi slt, %1, %c0_i32_2 : i32
    %6 = arith.xori %4, %5 : i1
    %7 = arith.andi %6, %3 : i1
    %8 = arith.addi %2, %1 : i32
    %9 = arith.select %7, %8, %2 : i32
    %c0_i32_3 = arith.constant 0 : i32
    %10 = arith.cmpi eq, %arg2, %c0_i32_3 : i32
    %11 = arith.extui %10 : i1 to i32
    %c0_i32_4 = arith.constant 0 : i32
    %12 = arith.cmpi ne, %11, %c0_i32_4 : i32
    scf.if %12 {
      %cst_24 = arith.constant 0.000000e+00 : f32
      %39 = vector.broadcast %cst_24 : f32 to vector<16x128xf32>
      %c0_25 = arith.constant 0 : index
      %c0_26 = arith.constant 0 : index
      %40 = vector.load %arg12[%c0_25, %c0_26] : memref<16x128xf32, #tpu.memory_space<vmem>>, vector<16x128xf32>
      tpu.vector_store %arg12[%c0_25, %c0_26], %39 {strides = array<i32>} : memref<16x128xf32, #tpu.memory_space<vmem>>, vector<16x128xf32>,
    } else {
    }
    %c128_i32 = arith.constant 128 : i32
    %13 = arith.muli %arg2, %c128_i32 : i32
    %14 = tpu.assume_multiple %13, 128 : i32
    %c0_i32_5 = arith.constant 0 : i32
    %15 = arith.cmpi eq, %arg0, %c0_i32_5 : i32
    %c0 = arith.constant 0 : index
    %c0_6 = arith.constant 0 : index
    %16 = vector.load %arg3[%c0, %c0_6] : memref<16x128xf32, #tpu.memory_space<vmem>>, vector<16x128xf32>
    %c1_i32_7 = arith.constant 1 : i32
    %17 = arith.cmpi eq, %9, %c1_i32_7 : i32
    %c0_8 = arith.constant 0 : index
    %18 = arith.index_cast %14 : i32 to index
    %19 = vector.load %arg10[%c0_8, %18] : memref<16x128xf32, #tpu.memory_space<vmem>>, vector<16x128xf32>
    %c0_9 = arith.constant 0 : index
    %20 = arith.index_cast %14 : i32 to index
    %21 = vector.load %arg11[%c0_9, %20] : memref<16x128xf32, #tpu.memory_space<vmem>>, vector<16x128xf32>
    %22 = arith.select %17, %19, %21 : vector<16x128xf32>
    %23 = arith.select %15, %16, %22 : vector<16x128xf32>
    %c0_10 = arith.constant 0 : index
    %c0_11 = arith.constant 0 : index
    %c0_12 = arith.constant 0 : index
    %24 = vector.load %arg7[%c0_10, %c0_11, %c0_12] : memref<1x16x16xf32, #tpu.memory_space<vmem>>, vector<1x16x16xf32>
    %25 = vector.shape_cast %24 : vector<1x16x16xf32> to vector<16x16xf32>
    %cst = arith.constant dense<0.000000e+00> : vector<16x128xf32>
    %26 = tpu.matmul %25, %23, %cst {dimension_numbers = #tpu.dot_dimension_numbers<[1], [0], [0], [1], [0, 0, 1, 1], [], []>} : vector<16x16xf32>, vector<16x128xf32>, vector<16x128xf32> -> vector<16x128xf32>
    %c0_13 = arith.constant 0 : index
    %c0_14 = arith.constant 0 : index
    %27 = vector.load %arg6[%c0_13, %c0_14] : memref<1x128xf32, #tpu.memory_space<vmem>>, vector<1x128xf32>
    %28 = vector.broadcast %27 : vector<1x128xf32> to vector<16x128xf32>
    %29 = arith.mulf %26, %28 : vector<16x128xf32>
    %c0_15 = arith.constant 0 : index
    %c0_16 = arith.constant 0 : index
    %30 = vector.load %arg12[%c0_15, %c0_16] : memref<16x128xf32, #tpu.memory_space<vmem>>, vector<16x128xf32>
    %31 = arith.truncf %29 : vector<16x128xf32> to vector<16x128xbf16>
    %c0_17 = arith.constant 0 : index
    %c0_18 = arith.constant 0 : index
    %32 = vector.load %arg4[%c0_17, %c0_18] : memref<128x128xbf16, #tpu.memory_space<vmem>>, vector<128x128xbf16>
    %cst_19 = arith.constant dense<0.000000e+00> : vector<16x128xf32>
    %33 = tpu.matmul %31, %32, %cst_19 {dimension_numbers = #tpu.dot_dimension_numbers<[1], [0], [0], [1], [0, 0, 1, 1], [], []>} : vector<16x128xbf16>, vector<128x128xbf16>, vector<16x128xf32> -> vector<16x128xf32>
    %34 = arith.addf %30, %33 : vector<16x128xf32>
    %c0_20 = arith.constant 0 : index
    %c0_21 = arith.constant 0 : index
    %35 = vector.load %arg12[%c0_20, %c0_21] : memref<16x128xf32, #tpu.memory_space<vmem>>, vector<16x128xf32>
    tpu.vector_store %arg12[%c0_20, %c0_21], %34 {strides = array<i32>} : memref<16x128xf32, #tpu.memory_space<vmem>>, vector<16x128xf32>,
    %c0_i32_22 = arith.constant 0 : i32
    %36 = arith.cmpi eq, %arg2, %c0_i32_22 : i32
    %37 = arith.extui %36 : i1 to i32
    %c0_i32_23 = arith.constant 0 : i32
    %38 = arith.cmpi ne, %37, %c0_i32_23 : i32
    scf.if %38 {
      %c0_24 = arith.constant 0 : index
      %c0_25 = arith.constant 0 : index
      %39 = vector.load %arg12[%c0_24, %c0_25] : memref<16x128xf32, #tpu.memory_space<vmem>>, vector<16x128xf32>
      %c0_26 = arith.constant 0 : index
      %c0_27 = arith.constant 0 : index
      %40 = vector.load %arg5[%c0_26, %c0_27] : memref<1x128xf32, #tpu.memory_space<vmem>>, vector<1x128xf32>
      %41 = vector.broadcast %40 : vector<1x128xf32> to vector<16x128xf32>
      %42 = arith.mulf %39, %41 : vector<16x128xf32>
      %c0_28 = arith.constant 0 : index
      %c0_29 = arith.constant 0 : index
      %c0_30 = arith.constant 0 : index
      %43 = vector.load %arg8[%c0_28, %c0_29, %c0_30] : memref<1x16x1xf32, #tpu.memory_space<vmem>>, vector<1x16x1xf32>
      %44 = vector.shape_cast %43 : vector<1x16x1xf32> to vector<16x1xf32>
      %45 = vector.broadcast %44 : vector<16x1xf32> to vector<16x128xf32>
      %46 = arith.addf %42, %45 : vector<16x128xf32>
      %47 = math.tanh %46 : vector<16x128xf32>
      %cst_31 = arith.constant 0.000000e+00 : f32
      %48 = vector.broadcast %cst_31 : f32 to vector<16x128xf32>
      %49 = arith.maximumf %47, %48 : vector<16x128xf32>
      %c0_32 = arith.constant 0 : index
      %c0_33 = arith.constant 0 : index
      %c0_34 = arith.constant 0 : index
      %50 = vector.load %arg9[%c0_32, %c0_33, %c0_34] : memref<1x16x128xf32, #tpu.memory_space<vmem>>, vector<1x16x128xf32>
      %51 = vector.shape_cast %50 : vector<1x16x128xf32> to vector<16x128xf32>
      %52 = vector.shape_cast %49 : vector<16x128xf32> to vector<1x16x128xf32>
      tpu.vector_store %arg9[%c0_32, %c0_33, %c0_34], %52 {strides = array<i32>} : memref<1x16x128xf32, #tpu.memory_space<vmem>>, vector<1x16x128xf32>,
      %c128_i32_35 = arith.constant 128 : i32
      %53 = arith.muli %arg1, %c128_i32_35 : i32
      %54 = tpu.assume_multiple %53, 128 : i32
      %c0_i32_36 = arith.constant 0 : i32
      %55 = arith.cmpi eq, %9, %c0_i32_36 : i32
      %56 = arith.extui %55 : i1 to i32
      %c0_i32_37 = arith.constant 0 : i32
      %57 = arith.cmpi ne, %56, %c0_i32_37 : i32
      scf.if %57 {
        %c0_40 = arith.constant 0 : index
        %61 = arith.index_cast %54 : i32 to index
        %62 = vector.load %arg10[%c0_40, %61] : memref<16x128xf32, #tpu.memory_space<vmem>>, vector<16x128xf32>
        tpu.vector_store %arg10[%c0_40, %61], %47 {strides = array<i32>} : memref<16x128xf32, #tpu.memory_space<vmem>>, vector<16x128xf32>,
      } else {
      }
      %c1_i32_38 = arith.constant 1 : i32
      %58 = arith.cmpi eq, %9, %c1_i32_38 : i32
      %59 = arith.extui %58 : i1 to i32
      %c0_i32_39 = arith.constant 0 : i32
      %60 = arith.cmpi ne, %59, %c0_i32_39 : i32
      scf.if %60 {
        %c0_40 = arith.constant 0 : index
        %61 = arith.index_cast %54 : i32 to index
        %62 = vector.load %arg11[%c0_40, %61] : memref<16x128xf32, #tpu.memory_space<vmem>>, vector<16x128xf32>
        tpu.vector_store %arg11[%c0_40, %61], %47 {strides = array<i32>} : memref<16x128xf32, #tpu.memory_space<vmem>>, vector<16x128xf32>,
      } else {
      }
    } else {
    }
    return
  }
  func.func @transform_0(%arg0: i32, %arg1: i32, %arg2: i32) -> (i32, i32) {
    %c0_i32 = arith.constant 0 : i32
    %c0_i32_0 = arith.constant 0 : i32
    return %c0_i32, %arg2 : i32, i32
  }
  func.func @transform_1(%arg0: i32, %arg1: i32, %arg2: i32) -> (i32, i32) {
    %c0_i32 = arith.constant 0 : i32
    return %arg2, %arg1 : i32, i32
  }
  func.func @transform_2(%arg0: i32, %arg1: i32, %arg2: i32) -> (i32, i32) {
    %c0_i32 = arith.constant 0 : i32
    %c0_i32_0 = arith.constant 0 : i32
    return %c0_i32, %arg1 : i32, i32
  }
  func.func @transform_3(%arg0: i32, %arg1: i32, %arg2: i32) -> (i32, i32) {
    %c0_i32 = arith.constant 0 : i32
    %c0_i32_0 = arith.constant 0 : i32
    return %c0_i32, %arg2 : i32, i32
  }
  func.func @transform_4(%arg0: i32, %arg1: i32, %arg2: i32) -> (i32, i32, i32) {
    %c0_i32 = arith.constant 0 : i32
    %c0_i32_0 = arith.constant 0 : i32
    %c0_i32_1 = arith.constant 0 : i32
    return %arg0, %c0_i32, %c0_i32_0 : i32, i32, i32
  }
  func.func @transform_5(%arg0: i32, %arg1: i32, %arg2: i32) -> (i32, i32, i32) {
    %c0_i32 = arith.constant 0 : i32
    %c0_i32_0 = arith.constant 0 : i32
    %c0_i32_1 = arith.constant 0 : i32
    return %arg0, %c0_i32, %c0_i32_0 : i32, i32, i32
  }
  func.func @transform_6(%arg0: i32, %arg1: i32, %arg2: i32) -> (i32, i32, i32) {
    %c0_i32 = arith.constant 0 : i32
    %c0_i32_0 = arith.constant 0 : i32
    return %arg0, %c0_i32, %arg1 : i32, i32, i32
  }
}

</mosaic_0001>

<llo_original>
// kernel: tpu_custom_call.1
$region0: #{tpu_custom_call.1}
  #allocation0 [shape = 'u32[]', space=smem, size = 0x4, offset = 0x4, fixed_abs, tag = 'smem constant byte address 0x4 - core index']
  #allocation1 [shape = 'u32[144,128]{1,0:T(1,128)}', space=vmem, size = 0x12000, scoped, tag = 'internal scratch']
  #allocation2 [shape = 'f32[16,128]{1,0:T(8,128)}', space=vmem, size = 0x2000, scoped, tag = 'scratch operand']
  #allocation3 [shape = 'f32[16,128]{1,0:T(8,128)}', space=vmem, size = 0x2000, scoped, tag = 'scratch operand']
  #allocation4 [shape = 'f32[16,128]{1,0:T(8,128)}', space=vmem, size = 0x2000, scoped, tag = 'scratch operand']
  %s0 = inlined_call_operand.hbm [shape: f32[16,128], index: 0, kind: input, shape index: {}]
  %s1 = inlined_call_operand.hbm [shape: bf16[128,128], index: 1, kind: input, shape index: {}]
  %s2 = inlined_call_operand.vmem [shape: f32[1,128], index: 2, kind: input, shape index: {}]
  %s3 = inlined_call_operand.vmem [shape: f32[1,128], index: 3, kind: input, shape index: {}]
  %s4 = inlined_call_operand.vmem [shape: f32[2,16,16], index: 4, kind: input, shape index: {}]
  %s5 = inlined_call_operand.vmem [shape: f32[2,16,1], index: 5, kind: input, shape index: {}]
  %s6 = inlined_call_operand.hbm [shape: f32[2,16,128], index: 6, kind: output, shape index: {}]
  %s7 = sld [smem:[#allocation0]]
  $region81: #{tpu_custom_call.1} parent=0
    _
  %s9 = ssub.s32 1, %s7
  %s10 = scalar_select 0, %s9, %s7
  $region1: #{tpu_custom_call.1} parent=0
    #allocation5 [shape = 'u8[8192]{0}', space=vmem, size = 0x2000, scoped, tag = 'input window, operand 0, single buffered']
    #allocation6 [shape = 's32[2]{0}', space=sflag, size = 0x8, scoped, tag = 'scoped memory for tpu_custom_call.1']
    #allocation7 [shape = 's32[2]{0}', space=sflag, size = 0x8, scoped, tag = 'scoped memory for tpu_custom_call.1']
    #allocation8 [shape = 'u8[32768]{0}', space=vmem, size = 0x8000, scoped, tag = 'input window, operand 1, single buffered']
    #allocation9 [shape = 's32[1]{0}', space=sflag, size = 0x4, scoped, tag = 'scoped memory for tpu_custom_call.1']
    #allocation10 [shape = 'u8[16384]{0}', space=vmem, size = 0x4000, scoped, tag = 'output window, operand 0']
    %11 = vsyncpa [#allocation6], 0
    %12 = vsyncpa [#allocation9], 0
    %13 = vsyncpa [#allocation7], 0
    %s14 = scalar_lea.sflag [#allocation7], 1
    %15 = vsyncpa %s14, 0
    loop: start=0, step=1, limit=4
    $region2: #{tpu_custom_call.1} parent=1 // loop_pre_header
      _
    $region3: #{tpu_custom_call.1} parent=1 // loop_header
      %s17 = sphi 0, %s21
      %p18 = scmp.ge.s32.totalorder %s17, 4
      %s24 = sphi 0, %s43
      %s25 = sphi 0, %s39
      %s26 = sphi 0, %s35
      %s27 = sphi 0, %s24
      %s28 = sphi 0, %s25
      %s29 = sphi 0, %s26
      %s30 = sphi 0, %s27
      %s31 = sphi 0, %s28
      %s32 = sphi 0, %s29
      %s46 = sphi 0, %s48
      %s49 = sphi 0, %s46
      %s50 = sphi 0, %s49
      %s66 = sphi 0, %s50
      %s74 = sphi 0, %s76
      %s77 = sphi 0, %s74
      %s78 = sphi 0, %s77
      %s94 = sphi 0, %s78
      %s100 = sphi 0, %s102
      %s103 = sphi 0, %s100
      %s104 = sphi 0, %s103
      %s120 = sphi 0, %s104
      %s126 = sphi 0, %s128
      %s129 = sphi 0, %s126
      %s130 = sphi 0, %s129
      %s146 = sphi 0, %s130
      %s152 = sphi 0, %s154
      %s155 = sphi 0, %s152
      %s156 = sphi 0, %s155
      %s172 = sphi 0, %s156
      %s178 = sphi 0, %s180
      %s181 = sphi 0, %s178
      %s182 = sphi 0, %s181
      %s198 = sphi 0, %s182
      %s206 = sphi 0, %s208
      %s209 = sphi 0, %s206
      %s210 = sphi 0, %s209
      %s226 = sphi 0, %s210
    $region4: #{tpu_custom_call.1} parent=1 // loop_header_branch
      %20 = sbr.rel (%p18) target = $region8
    $region5: #{tpu_custom_call.1} parent=1 // loop_body
      %s22 = ssub.s32 %s17, 1
      %s23 = ssub.s32 %s17, 2
      %s33 = sadd.s32 1, %s26
      %p34 = scmp.ge.s32.totalorder %s33, 1
      %s35 = scalar_select %p34, 0, %s33
      %s36 = sadd.s32 1, %s25
      %s37 = scalar_select %p34, %s36, %s25
      %p38 = scmp.ge.s32.totalorder %s37, 1
      %s39 = scalar_select %p38, 0, %s37
      %s40 = sadd.s32 1, %s24
      %s41 = scalar_select %p38, %s40, %s24
      %p42 = scmp.ge.s32.totalorder %s41, 2
      %s43 = scalar_select %p42, 0, %s41
      %s44 = ssub.s32 %s26, %s35
      %p45 = scmp.eq.s32.totalorder %s44, 0
      %s47 = sadd.s32 %s46, 1
      %s48 = scalar_select %p45, %s46, %s47
      %p51 = pneg %p45
      %p52 = scmp.eq.s32.totalorder %s17, 1
      %p53 = por %p51, %p52
      %p54 = scmp.ne.s32.totalorder %s46, %s49
      %p55 = scmp.eq.s32.totalorder %s17, 0
      %p56 = por %p54, %p55
      %p57 = scmp.ne.s32.totalorder %s46, %s49
      %p58 = scmp.eq.s32.totalorder %s22, 1
      %p59 = por %p57, %p58
      %p60 = scmp.ne.s32.totalorder %s49, %s50
      %p61 = scmp.eq.s32.totalorder %s22, 0
      %p62 = por %p60, %p61
      %p63 = scmp.ne.s32.totalorder %s49, %s50
      %p64 = scmp.eq.s32.totalorder %s23, 1
      %p65 = por %p63, %p64
      %p67 = scmp.ne.s32.totalorder %s50, %s66
      %p68 = scmp.eq.s32.totalorder %s23, 0
      %p69 = por %p67, %p68
      %s70 = ssub.s32 %s26, %s35
      %s71 = ssub.s32 %s25, %s39
      %s72 = sor.u32 %s70, %s71
      %p73 = scmp.eq.s32.totalorder %s72, 0
      %s75 = sadd.s32 %s74, 1
      %s76 = scalar_select %p73, %s74, %s75
      %p79 = pneg %p73
      %p80 = scmp.eq.s32.totalorder %s17, 1
      %p81 = por %p79, %p80
      %p82 = scmp.ne.s32.totalorder %s74, %s77
      %p83 = scmp.eq.s32.totalorder %s17, 0
      %p84 = por %p82, %p83
      %p85 = scmp.ne.s32.totalorder %s74, %s77
      %p86 = scmp.eq.s32.totalorder %s22, 1
      %p87 = por %p85, %p86
      %p88 = scmp.ne.s32.totalorder %s77, %s78
      %p89 = scmp.eq.s32.totalorder %s22, 0
      %p90 = por %p88, %p89
      %p91 = scmp.ne.s32.totalorder %s77, %s78
      %p92 = scmp.eq.s32.totalorder %s23, 1
      %p93 = por %p91, %p92
      %p95 = scmp.ne.s32.totalorder %s78, %s94
      %p96 = scmp.eq.s32.totalorder %s23, 0
      %p97 = por %p95, %p96
      %s98 = ssub.s32 %s25, %s39
      %p99 = scmp.eq.s32.totalorder %s98, 0
      %s101 = sadd.s32 %s100, 1
      %s102 = scalar_select %p99, %s100, %s101
      %p105 = pneg %p99
      %p106 = scmp.eq.s32.totalorder %s17, 1
      %p107 = por %p105, %p106
      %p108 = scmp.ne.s32.totalorder %s100, %s103
      %p109 = scmp.eq.s32.totalorder %s17, 0
      %p110 = por %p108, %p109
      %p111 = scmp.ne.s32.totalorder %s100, %s103
      %p112 = scmp.eq.s32.totalorder %s22, 1
      %p113 = por %p111, %p112
      %p114 = scmp.ne.s32.totalorder %s103, %s104
      %p115 = scmp.eq.s32.totalorder %s22, 0
      %p116 = por %p114, %p115
      %p117 = scmp.ne.s32.totalorder %s103, %s104
      %p118 = scmp.eq.s32.totalorder %s23, 1
      %p119 = por %p117, %p118
      %p121 = scmp.ne.s32.totalorder %s104, %s120
      %p122 = scmp.eq.s32.totalorder %s23, 0
      %p123 = por %p121, %p122
      %s124 = ssub.s32 %s26, %s35
      %p125 = scmp.eq.s32.totalorder %s124, 0
      %s127 = sadd.s32 %s126, 1
      %s128 = scalar_select %p125, %s126, %s127
      %p131 = pneg %p125
      %p132 = scmp.eq.s32.totalorder %s17, 1
      %p133 = por %p131, %p132
      %p134 = scmp.ne.s32.totalorder %s126, %s129
      %p135 = scmp.eq.s32.totalorder %s17, 0
      %p136 = por %p134, %p135
      %p137 = scmp.ne.s32.totalorder %s126, %s129
      %p138 = scmp.eq.s32.totalorder %s22, 1
      %p139 = por %p137, %p138
      %p140 = scmp.ne.s32.totalorder %s129, %s130
      %p141 = scmp.eq.s32.totalorder %s22, 0
      %p142 = por %p140, %p141
      %p143 = scmp.ne.s32.totalorder %s129, %s130
      %p144 = scmp.eq.s32.totalorder %s23, 1
      %p145 = por %p143, %p144
      %p147 = scmp.ne.s32.totalorder %s130, %s146
      %p148 = scmp.eq.s32.totalorder %s23, 0
      %p149 = por %p147, %p148
      %s150 = ssub.s32 %s24, %s43
      %p151 = scmp.eq.s32.totalorder %s150, 0
      %s153 = sadd.s32 %s152, 1
      %s154 = scalar_select %p151, %s152, %s153
      %p157 = pneg %p151
      %p158 = scmp.eq.s32.totalorder %s17, 1
      %p159 = por %p157, %p158
      %p160 = scmp.ne.s32.totalorder %s152, %s155
      %p161 = scmp.eq.s32.totalorder %s17, 0
      %p162 = por %p160, %p161
      %p163 = scmp.ne.s32.totalorder %s152, %s155
      %p164 = scmp.eq.s32.totalorder %s22, 1
      %p165 = por %p163, %p164
      %p166 = scmp.ne.s32.totalorder %s155, %s156
      %p167 = scmp.eq.s32.totalorder %s22, 0
      %p168 = por %p166, %p167
      %p169 = scmp.ne.s32.totalorder %s155, %s156
      %p170 = scmp.eq.s32.totalorder %s23, 1
      %p171 = por %p169, %p170
      %p173 = scmp.ne.s32.totalorder %s156, %s172
      %p174 = scmp.eq.s32.totalorder %s23, 0
      %p175 = por %p173, %p174
      %s176 = ssub.s32 %s24, %s43
      %p177 = scmp.eq.s32.totalorder %s176, 0
      %s179 = sadd.s32 %s178, 1
      %s180 = scalar_select %p177, %s178, %s179
      %p183 = pneg %p177
      %p184 = scmp.eq.s32.totalorder %s17, 1
      %p185 = por %p183, %p184
      %p186 = scmp.ne.s32.totalorder %s178, %s181
      %p187 = scmp.eq.s32.totalorder %s17, 0
      %p188 = por %p186, %p187
      %p189 = scmp.ne.s32.totalorder %s178, %s181
      %p190 = scmp.eq.s32.totalorder %s22, 1
      %p191 = por %p189, %p190
      %p192 = scmp.ne.s32.totalorder %s181, %s182
      %p193 = scmp.eq.s32.totalorder %s22, 0
      %p194 = por %p192, %p193
      %p195 = scmp.ne.s32.totalorder %s181, %s182
      %p196 = scmp.eq.s32.totalorder %s23, 1
      %p197 = por %p195, %p196
      %p199 = scmp.ne.s32.totalorder %s182, %s198
      %p200 = scmp.eq.s32.totalorder %s23, 0
      %p201 = por %p199, %p200
      %s202 = ssub.s32 %s24, %s43
      %s203 = ssub.s32 %s25, %s39
      %s204 = sor.u32 %s202, %s203
      %p205 = scmp.eq.s32.totalorder %s204, 0
      %s207 = sadd.s32 %s206, 1
      %s208 = scalar_select %p205, %s206, %s207
      %p211 = pneg %p205
      %p212 = scmp.eq.s32.totalorder %s17, 1
      %p213 = por %p211, %p212
      %p214 = scmp.ne.s32.totalorder %s206, %s209
      %p215 = scmp.eq.s32.totalorder %s17, 0
      %p216 = por %p214, %p215
      %p217 = scmp.ne.s32.totalorder %s206, %s209
      %p218 = scmp.eq.s32.totalorder %s22, 1
      %p219 = por %p217, %p218
      %p220 = scmp.ne.s32.totalorder %s209, %s210
      %p221 = scmp.eq.s32.totalorder %s22, 0
      %p222 = por %p220, %p221
      %p223 = scmp.ne.s32.totalorder %s209, %s210
      %p224 = scmp.eq.s32.totalorder %s23, 1
      %p225 = por %p223, %p224
      %p227 = scmp.ne.s32.totalorder %s210, %s226
      %p228 = scmp.eq.s32.totalorder %s23, 0
      %p229 = por %p227, %p228
      %p230 = scmp.le.s32.totalorder 1, %s17
      %p231 = scmp.lt.s32.totalorder %s17, 3
      %p232 = pnand %p230, %p231
      %p233 = pneg %p232
      // Predicated region
      $region9: #{tpu_custom_call.1} parent=5 // pred_check
        _
      $region10: #{tpu_custom_call.1} parent=5 // pred_check_branch
        %235 = sbr.rel (%p232) target = $region12
      $region11: #{tpu_custom_call.1} parent=5 // pred_region
        %s236 = ssub.s32 %s17, 1
        // Predicated region
        $region13: #{tpu_custom_call.1} parent=11 // pred_check
          %p237 = pneg %p62
        $region14: #{tpu_custom_call.1} parent=11 // pred_check_branch
          %239 = sbr.rel (%p237) target = $region16
        $region15: #{tpu_custom_call.1} parent=11 // pred_region
          %s241 = ssub.s32 256, 256
          %242 = vsyncadd [#allocation6], %s241
          %s243 = smul.addr %s29, 128
          %s244 = scalar_lea.hbm %s0, %s243
          %s245 = sshll.u32 [#allocation5], 4
          %s246 = int_to_ptr.vmem [resolvable:$true] %s245
          %251 = dma.hbm_to_vmem [thread:$0]  %s244, 256, %s246, [#allocation6], 128, 128, 8
        $region16: #{tpu_custom_call.1} parent=11 // pred_fallthru
          _
        // Predicated region
        $region17: #{tpu_custom_call.1} parent=11 // pred_check
          %p252 = pneg %p90
        $region18: #{tpu_custom_call.1} parent=11 // pred_check_branch
          %254 = sbr.rel (%p252) target = $region20
        $region19: #{tpu_custom_call.1} parent=11 // pred_region
          %s255 = smul.u32 16, %s29
          %s257 = ssub.s32 1024, 1024
          %258 = vsyncadd [#allocation9], %s257
          %s259 = sadd.s32 %s28, %s255
          %s260 = smul.addr %s259, 64
          %s261 = scalar_lea.hbm %s1, %s260
          %s262 = sshll.u32 [#allocation8], 4
          %s263 = int_to_ptr.vmem [resolvable:$true] %s262
          %268 = dma.hbm_to_vmem [thread:$0]  %s261, 1024, %s263, [#allocation9], 64, 64, 4
        $region20: #{tpu_custom_call.1} parent=11 // pred_fallthru
          _
        // Predicated region
        $region21: #{tpu_custom_call.1} parent=11 // pred_check
          %p269 = pneg %p116
        $region22: #{tpu_custom_call.1} parent=11 // pred_check_branch
          %271 = sbr.rel (%p269) target = $region24
        $region23: #{tpu_custom_call.1} parent=11 // pred_region
          %p272 = scmp.lt.s32.totalorder %s28, 0
          %s273 = scalar_select %p272, %s28, 0
          %s274 = scalar_lea.vmem %s2, %s273
        $region24: #{tpu_custom_call.1} parent=11 // pred_fallthru
          _
        // Predicated region
        $region25: #{tpu_custom_call.1} parent=11 // pred_check
          %p275 = pneg %p142
        $region26: #{tpu_custom_call.1} parent=11 // pred_check_branch
          %277 = sbr.rel (%p275) target = $region28
        $region27: #{tpu_custom_call.1} parent=11 // pred_region
          %p278 = scmp.lt.s32.totalorder %s29, 0
          %s279 = scalar_select %p278, %s29, 0
          %s280 = scalar_lea.vmem %s3, %s279
        $region28: #{tpu_custom_call.1} parent=11 // pred_fallthru
          _
      $region12: #{tpu_custom_call.1} parent=5 // pred_fallthru
        _
      %p281 = scmp.lt.s32.totalorder %s17, 2
      // Predicated region
      $region29: #{tpu_custom_call.1} parent=5 // pred_check
        %p282 = pneg %p281
      $region30: #{tpu_custom_call.1} parent=5 // pred_check_branch
        %284 = sbr.rel (%p282) target = $region32
      $region31: #{tpu_custom_call.1} parent=5 // pred_region
        // Predicated region
        $region33: #{tpu_custom_call.1} parent=31 // pred_check
          %p285 = pneg %p162
        $region34: #{tpu_custom_call.1} parent=31 // pred_check_branch
          %287 = sbr.rel (%p285) target = $region36
        $region35: #{tpu_custom_call.1} parent=31 // pred_region
          %p288 = scmp.lt.s32.totalorder %s24, 1
          %s289 = scalar_select %p288, %s24, 1
          %s290 = smul.addr %s289, 2
          %s291 = smul.addr %s290, 8
          %s292 = scalar_lea.vmem %s4, %s291
        $region36: #{tpu_custom_call.1} parent=31 // pred_fallthru
          _
        // Predicated region
        $region37: #{tpu_custom_call.1} parent=31 // pred_check
          %p293 = pneg %p188
        $region38: #{tpu_custom_call.1} parent=31 // pred_check_branch
          %295 = sbr.rel (%p293) target = $region40
        $region39: #{tpu_custom_call.1} parent=31 // pred_region
          %p296 = scmp.lt.s32.totalorder %s24, 1
          %s297 = scalar_select %p296, %s24, 1
          %s298 = smul.addr %s297, 2
          %s299 = smul.addr %s298, 8
          %s300 = scalar_lea.vmem %s5, %s299
        $region40: #{tpu_custom_call.1} parent=31 // pred_fallthru
          _
      $region32: #{tpu_custom_call.1} parent=5 // pred_fallthru
        _
      %p301 = scmp.le.s32.totalorder 1, %s17
      %p302 = scmp.lt.s32.totalorder %s17, 3
      %p303 = pnand %p301, %p302
      %p304 = pneg %p303
      // Predicated region
      $region41: #{tpu_custom_call.1} parent=5 // pred_check
        _
      $region42: #{tpu_custom_call.1} parent=5 // pred_check_branch
        %306 = sbr.rel (%p303) target = $region44
      $region43: #{tpu_custom_call.1} parent=5 // pred_region
        %s307 = ssub.s32 %s17, 1
        // Predicated region
        $region45: #{tpu_custom_call.1} parent=43 // pred_check
          %p308 = pneg %p62
        $region46: #{tpu_custom_call.1} parent=43 // pred_check_branch
          %310 = sbr.rel (%p308) target = $region48
        $region47: #{tpu_custom_call.1} parent=43 // pred_region
          %311 = dma.done [#allocation6], 256
        $region48: #{tpu_custom_call.1} parent=43 // pred_fallthru
          _
        // Predicated region
        $region49: #{tpu_custom_call.1} parent=43 // pred_check
          %p312 = pneg %p90
        $region50: #{tpu_custom_call.1} parent=43 // pred_check_branch
          %314 = sbr.rel (%p312) target = $region52
        $region51: #{tpu_custom_call.1} parent=43 // pred_region
          %315 = dma.done [#allocation9], 1024
        $region52: #{tpu_custom_call.1} parent=43 // pred_fallthru
          _
        %p316 = pneg %p62
        %p317 = pneg %p59
        %p318 = pneg %p90
        %p319 = pneg %p87
        %p320 = scmp.lt.s32.totalorder %s28, 0
        %s321 = scalar_select %p320, %s28, 0
        %s322 = scalar_lea.vmem %s2, %s321
        %p323 = pneg %p116
        %p324 = pneg %p113
        %p325 = scmp.lt.s32.totalorder %s29, 0
        %s326 = scalar_select %p325, %s29, 0
        %s327 = scalar_lea.vmem %s3, %s326
        %p328 = pneg %p142
        %p329 = pneg %p139
        %p330 = scmp.lt.s32.totalorder %s27, 1
        %s331 = scalar_select %p330, %s27, 1
        %s332 = smul.addr %s331, 2
        %s333 = smul.addr %s332, 8
        %s334 = scalar_lea.vmem %s4, %s333
        %p335 = pneg %p168
        %p336 = pneg %p165
        %p337 = scmp.lt.s32.totalorder %s27, 1
        %s338 = scalar_select %p337, %s27, 1
        %s339 = smul.addr %s338, 2
        %s340 = smul.addr %s339, 8
        %s341 = scalar_lea.vmem %s5, %s340
        %p342 = pneg %p194
        %p343 = pneg %p191
        %p344 = pneg %p222
        %p345 = pneg %p219
        %s346 = sand.u32 %s209, 1
        %s347 = scalar_lea.sflag [#allocation7], %s346
        %s348 = sand.u32 %s209, 1
        %s349 = smul.addr %s348, 16
        %s350 = scalar_lea.vmem [#allocation10], %s349
        %s351 = smul.u32 16, %s29
        %p352 = scmp.lt.s32.totalorder %s28, 0
        %s353 = scalar_select %p352, %s28, 0
        %s354 = scalar_lea.vmem %s2, %s353
        %p355 = scmp.lt.s32.totalorder %s29, 0
        %s356 = scalar_select %p355, %s29, 0
        %s357 = scalar_lea.vmem %s3, %s356
        %p358 = scmp.lt.s32.totalorder %s27, 1
        %s359 = scalar_select %p358, %s27, 1
        %s360 = smul.addr %s359, 2
        %s361 = smul.addr %s360, 8
        %s362 = scalar_lea.vmem %s4, %s361
        %p363 = scmp.lt.s32.totalorder %s27, 1
        %s364 = scalar_select %p363, %s27, 1
        %s365 = smul.addr %s364, 2
        %s366 = smul.addr %s365, 8
        %s367 = scalar_lea.vmem %s5, %s366
        %p369 = scmp.lt.s32.totalorder %s27, 0
        %s370 = ssub.s32 0, %s27
        %s371 = scalar_select %p369, %s370, %s27
        %s372 = sand.u32 %s371, 1
        %s373 = ssub.s32 0, %s372
        %s374 = scalar_select %p369, %s373, %s372
        %p375 = scmp.ne.s32.totalorder %s374, 0
        %p376 = scmp.lt.s32.totalorder %s374, 0
        %p377 = pnand %p376, %p375
        %p378 = pneg %p377
        %s379 = sadd.s32 %s374, 2
        %s380 = scalar_select %p378, %s379, %s374
        %p381 = scmp.eq.s32.totalorder %s29, 0
        // Predicated region
        $region53: #{tpu_custom_call.1} parent=43 // pred_check
          %p382 = pneg %p381
        $region54: #{tpu_custom_call.1} parent=43 // pred_check_branch
          %384 = sbr.rel (%p382) target = $region56
        $region55: #{tpu_custom_call.1} parent=43 // pred_region
          %385 = vst [vmem:[#allocation4] sm:$0xff] 0.0
          %386 = vst [vmem:[#allocation4 + $0x8] sm:$0xff] 0.0
        $region56: #{tpu_custom_call.1} parent=43 // pred_fallthru
          _
        %s387 = smul.u32 %s29, 128
        %p388 = scmp.eq.s32.totalorder %s27, 0
        %v389 = vld [vmem:[#allocation5] sm:$0xff]
        %v390 = vld [vmem:[#allocation5 + $0x8] sm:$0xff]
        %p391 = scmp.eq.s32.totalorder %s380, 1
        %s392 = sshra.s32 %s387, 7
        %s393 = sand.u32 %s387, 127
        %s394 = scalar_lea.vmem [#allocation2], %s392
        %v395 = vld [vmem:[%s394] sm:$0xff]
        %v396 = vld [vmem:[%s394 + $0x8] sm:$0xff]
        %s397 = scalar_lea.vmem [#allocation3], %s392
        %v398 = vld [vmem:[%s397] sm:$0xff]
        %v399 = vld [vmem:[%s397 + $0x8] sm:$0xff]
        %s400 = scalar_select %p391, 1, 0
        %v401 = vstv %s400
        %vm402 = vcmp.eq.s32.totalorder %v401, 1
        %v403 = vsel %vm402, %v395, %v398
        %v404 = vsel %vm402, %v396, %v399
        %s405 = scalar_select %p388, 1, 0
        %v406 = vstv %s405
        %vm407 = vcmp.eq.s32.totalorder %v406, 1
        %v408 = vsel %vm407, %v389, %v403
        %v409 = vsel %vm407, %v390, %v404
        %v410 = vld [vmem:[%s362] sm:$0xff]
        %v411 = vld [vmem:[%s362 + $0x8] sm:$0xff]
        %vm412 = vcmask 130048
        %v414 = vsel %vm412, %v410, 0
        %v417 = vsel %vm412, %v411, 0
        %419 = vmatprep.subr.mxu0 0.0
        %420 = vmatpush1.msra.mxu0 0.0
        %421 = vmatprep.subr.mxu0 0.0
        %422 = vmatpush1.msra.mxu0 0.0
        %423 = vmatprep.subr.mxu0 0.0
        %424 = vmatpush1.msra.mxu0 0.0
        %425 = vmatprep.subr.mxu0 0.0
        %426 = vmatpush1.msra.mxu0 0.0
        %427 = vmatprep.subr.mxu0 0.0
        %428 = vmatpush1.msra.mxu0 0.0
        %429 = vmatprep.subr.mxu0 0.0
        %430 = vmatpush1.msra.mxu0 0.0
        %431 = vmatprep.subr.mxu0 0.0
        %432 = vmatpush1.msra.mxu0 0.0
        %433 = vmatprep.subr.mxu0 0.0
        %434 = vmatpush1.msra.mxu0 0.0
        %435 = vmatprep.subr.mxu0 0.0
        %436 = vmatpush1.msra.mxu0 0.0
        %437 = vmatprep.subr.mxu0 0.0
        %438 = vmatpush1.msra.mxu0 0.0
        %439 = vmatprep.subr.mxu0 0.0
        %440 = vmatpush1.msra.mxu0 0.0
        %441 = vmatprep.subr.mxu0 0.0
        %442 = vmatpush1.msra.mxu0 0.0
        %443 = vmatprep.subr.mxu0 0.0
        %444 = vmatpush1.msra.mxu0 0.0
        %445 = vmatprep.subr.mxu0 0.0
        %446 = vmatpush1.msra.mxu0 0.0
        %447 = vmatprep.subr.mxu0 0.0
        %448 = vmatpush1.msra.mxu0 %v409
        %449 = vmatprep.subr.mxu0 0.0
        %450 = vmatpush1.msra.mxu0 %v408
        %451 = vmatprep.subr.mxu0 0.0
        %452 = vmatpush2.msra.mxu0 0.0
        %453 = vmatprep.subr.mxu0 0.0
        %454 = vmatpush2.msra.mxu0 0.0
        %455 = vmatprep.subr.mxu0 0.0
        %456 = vmatpush2.msra.mxu0 0.0
        %457 = vmatprep.subr.mxu0 0.0
        %458 = vmatpush2.msra.mxu0 0.0
        %459 = vmatprep.subr.mxu0 0.0
        %460 = vmatpush2.msra.mxu0 0.0
        %461 = vmatprep.subr.mxu0 0.0
        %462 = vmatpush2.msra.mxu0 0.0
        %463 = vmatprep.subr.mxu0 0.0
        %464 = vmatpush2.msra.mxu0 0.0
        %465 = vmatprep.subr.mxu0 0.0
        %466 = vmatpush2.msra.mxu0 0.0
        %467 = vmatprep.subr.mxu0 0.0
        %468 = vmatpush2.msra.mxu0 0.0
        %469 = vmatprep.subr.mxu0 0.0
        %470 = vmatpush2.msra.mxu0 0.0
        %471 = vmatprep.subr.mxu0 0.0
        %472 = vmatpush2.msra.mxu0 0.0
        %473 = vmatprep.subr.mxu0 0.0
        %474 = vmatpush2.msra.mxu0 0.0
        %475 = vmatprep.subr.mxu0 0.0
        %476 = vmatpush2.msra.mxu0 0.0
        %477 = vmatprep.subr.mxu0 0.0
        %478 = vmatpush2.msra.mxu0 0.0
        %479 = vmatprep.subr.mxu0 0.0
        %480 = vmatpush2.msra.mxu0 0.0
        %481 = vmatprep.subr.mxu0 0.0
        %482 = vmatpush2.msra.mxu0 0.0
        %483 = vmatprep.mubr.f32.mxu0 0.0
        %484 = vmatmul.mubr.f32.gmra.mxu0 %v414
        %v485 = vpop.f32.mrf.mxu0
        %v486 = vadd.f32 0.0, %v485
        %v487 = vpop.f32.mrf.mxu0
        %488 = vmatprep.mubr.f32.mxu0 0.0
        %489 = vmatmul.mubr.f32.gmra.mxu0 %v417
        %v490 = vpop.f32.mrf.mxu0
        %v491 = vadd.f32 0.0, %v490
        %v492 = vpop.f32.mrf.mxu0
        %493 = vdwg.mxu0
        %v494 = vld [vmem:[%s357] sm:$0x1]
        %v496 = vlaneseq
        %v497 = vshrl.u32 %v496, 7
        %v498 = vsub.s32 0, %v497
        %v499 = vrot.slane %v494, %v498
        %v501 = vmul.f32 %v486, %v499
        %v502 = vmul.f32 %v491, %v499
        %v503 = vld [vmem:[#allocation4] sm:$0xff]
        %v504 = vld [vmem:[#allocation4 + $0x8] sm:$0xff]
        %v505 = vpack.c.bf16 %v502, %v501
        %v506 = vld [vmem:[#allocation8] sm:$0xf]
        %v507 = vld [vmem:[#allocation8 + $0x4] sm:$0xf]
        %v508 = vld [vmem:[#allocation8 + $0x8] sm:$0xf]
        %v509 = vld [vmem:[#allocation8 + $0xc] sm:$0xf]
        %v510 = vld [vmem:[#allocation8 + $0x10] sm:$0xf]
        %v511 = vld [vmem:[#allocation8 + $0x14] sm:$0xf]
        %v512 = vld [vmem:[#allocation8 + $0x18] sm:$0xf]
        %v513 = vld [vmem:[#allocation8 + $0x1c] sm:$0xf]
        %v514 = vld [vmem:[#allocation8 + $0x20] sm:$0xf]
        %v515 = vld [vmem:[#allocation8 + $0x24] sm:$0xf]
        %v516 = vld [vmem:[#allocation8 + $0x28] sm:$0xf]
        %v517 = vld [vmem:[#allocation8 + $0x2c] sm:$0xf]
        %v518 = vld [vmem:[#allocation8 + $0x30] sm:$0xf]
        %v519 = vld [vmem:[#allocation8 + $0x34] sm:$0xf]
        %v520 = vld [vmem:[#allocation8 + $0x38] sm:$0xf]
        %v521 = vld [vmem:[#allocation8 + $0x3c] sm:$0xf]
        %v538 = vunpack.c.l.b16 %v506
        %v539 = vunpack.c.l.b16 %v507
        %v540 = vunpack.c.l.b16 %v508
        %v541 = vunpack.c.l.b16 %v509
        %v542 = vunpack.c.l.b16 %v510
        %v543 = vunpack.c.l.b16 %v511
        %v544 = vunpack.c.l.b16 %v512
        %v545 = vunpack.c.l.b16 %v513
        %v546 = vunpack.c.l.b16 %v514
        %v547 = vunpack.c.l.b16 %v515
        %v548 = vunpack.c.l.b16 %v516
        %v549 = vunpack.c.l.b16 %v517
        %v550 = vunpack.c.l.b16 %v518
        %v551 = vunpack.c.l.b16 %v519
        %v552 = vunpack.c.l.b16 %v520
        %v553 = vunpack.c.l.b16 %v521
        %v554 = vpack.c.b16 %v539, %v538
        %v555 = vpack.c.b16 %v541, %v540
        %v556 = vpack.c.b16 %v543, %v542
        %v557 = vpack.c.b16 %v545, %v544
        %v558 = vpack.c.b16 %v547, %v546
        %v559 = vpack.c.b16 %v549, %v548
        %v560 = vpack.c.b16 %v551, %v550
        %v561 = vpack.c.b16 %v553, %v552
        %570 = vmatprep.subr.bf16.mxu0 0
        %571 = vmatpush1.bf16.msra.mxu0 %v561
        %572 = vmatprep.subr.bf16.mxu0 0
        %573 = vmatpush1.bf16.msra.mxu0 %v560
        %574 = vmatprep.subr.bf16.mxu0 0
        %575 = vmatpush1.bf16.msra.mxu0 %v559
        %576 = vmatprep.subr.bf16.mxu0 0
        %577 = vmatpush1.bf16.msra.mxu0 %v558
        %578 = vmatprep.subr.bf16.mxu0 0
        %579 = vmatpush1.bf16.msra.mxu0 %v557
        %580 = vmatprep.subr.bf16.mxu0 0
        %581 = vmatpush1.bf16.msra.mxu0 %v556
        %582 = vmatprep.subr.bf16.mxu0 0
        %583 = vmatpush1.bf16.msra.mxu0 %v555
        %584 = vmatprep.subr.bf16.mxu0 0
        %585 = vmatpush1.bf16.msra.mxu0 %v554
        %586 = vmatprep.subr.bf16.mxu0 0
        %587 = vmatpush2.bf16.msra.mxu0 0
        %588 = vmatprep.subr.bf16.mxu0 0
        %589 = vmatpush2.bf16.msra.mxu0 0
        %590 = vmatprep.subr.bf16.mxu0 0
        %591 = vmatpush2.bf16.msra.mxu0 0
        %592 = vmatprep.subr.bf16.mxu0 0
        %593 = vmatpush2.bf16.msra.mxu0 0
        %594 = vmatprep.subr.bf16.mxu0 0
        %595 = vmatpush2.bf16.msra.mxu0 0
        %596 = vmatprep.subr.bf16.mxu0 0
        %597 = vmatpush2.bf16.msra.mxu0 0
        %598 = vmatprep.subr.bf16.mxu0 0
        %599 = vmatpush2.bf16.msra.mxu0 0
        %600 = vmatprep.subr.bf16.mxu0 0
        %601 = vmatpush2.bf16.msra.mxu0 0
        %602 = vmatprep.mubr.bf16.mxu0 0
        %603 = vmatmul.mubr.bf16.gmra.mxu0 %v505
        %v604 = vpop.f32.mrf.mxu0
        %v605 = vadd.f32 0.0, %v604
        %v606 = vpop.f32.mrf.mxu0
        %v607 = vpop.f32.mrf.mxu0
        %v608 = vadd.f32 0.0, %v607
        %v609 = vpop.f32.mrf.mxu0
        %610 = vdwg.mxu0
        %v611 = vadd.f32 %v503, %v605
        %v612 = vadd.f32 %v504, %v608
        %613 = vst [vmem:[#allocation4] sm:$0xff] %v611
        %614 = vst [vmem:[#allocation4 + $0x8] sm:$0xff] %v612
        // Predicated region
        $region57: #{tpu_custom_call.1} parent=43 // pred_check
          %p615 = pneg %p381
        $region58: #{tpu_custom_call.1} parent=43 // pred_check_branch
          %617 = sbr.rel (%p615) target = $region60
        $region59: #{tpu_custom_call.1} parent=43 // pred_region
          %v618 = vld [vmem:[#allocation4] sm:$0xff]
          %v619 = vld [vmem:[#allocation4 + $0x8] sm:$0xff]
          %v620 = vld [vmem:[%s354] sm:$0x1]
          %v622 = vlaneseq
          %v623 = vshrl.u32 %v622, 7
          %v624 = vsub.s32 0, %v623
          %v625 = vrot.slane %v620, %v624
          %v627 = vmul.f32 %v618, %v625
          %v628 = vmul.f32 %v619, %v625
          %v629 = vld [vmem:[%s367] sm:$0xff]
          %v630 = vld [vmem:[%s367 + $0x8] sm:$0xff]
          %632 = vset.pattern.permute.xlu0 0
          %633 = vperm.xlu0 %632, %v629
          %v634 = vpop.permute.xlu0 %633
          %637 = vset.pattern.permute.xlu0 0
          %638 = vperm.xlu0 %637, %v630
          %v639 = vpop.permute.xlu0 %638
          %v641 = vadd.f32 %v627, %v634
          %v642 = vadd.f32 %v628, %v639
          %v643 = vtanh.pop %v641
          %v644 = vtanh.pop %v642
          %v645 = vmax.f32 %v643, 0.0
          %v646 = vmax.f32 %v644, 0.0
          %647 = vst [vmem:[%s350] sm:$0xff] %v645
          %648 = vst [vmem:[%s350 + $0x8] sm:$0xff] %v646
          %s649 = smul.u32 %s28, 128
          %p650 = scmp.eq.s32.totalorder %s380, 0
          // Predicated region
          $region61: #{tpu_custom_call.1} parent=59 // pred_check
            %p651 = pneg %p650
          $region62: #{tpu_custom_call.1} parent=59 // pred_check_branch
            %653 = sbr.rel (%p651) target = $region64
          $region63: #{tpu_custom_call.1} parent=59 // pred_region
            %s654 = sshra.s32 %s649, 7
            %s655 = sand.u32 %s649, 127
            %s656 = scalar_lea.vmem [#allocation2], %s654
            %657 = vst [vmem:[%s656] sm:$0xff] %v643
            %658 = vst [vmem:[%s656 + $0x8] sm:$0xff] %v644
          $region64: #{tpu_custom_call.1} parent=59 // pred_fallthru
            _
          // Predicated region
          $region65: #{tpu_custom_call.1} parent=59 // pred_check
            %p659 = pneg %p391
          $region66: #{tpu_custom_call.1} parent=59 // pred_check_branch
            %661 = sbr.rel (%p659) target = $region68
          $region67: #{tpu_custom_call.1} parent=59 // pred_region
            %s662 = sshra.s32 %s649, 7
            %s663 = sand.u32 %s649, 127
            %s664 = scalar_lea.vmem [#allocation3], %s662
            %665 = vst [vmem:[%s664] sm:$0xff] %v643
            %666 = vst [vmem:[%s664 + $0x8] sm:$0xff] %v644
          $region68: #{tpu_custom_call.1} parent=59 // pred_fallthru
            _
        $region60: #{tpu_custom_call.1} parent=43 // pred_fallthru
          _
        %s667 = sand.u32 %s209, 1
        %s668 = scalar_lea.sflag [#allocation7], %s667
        %s669 = sand.u32 %s209, 1
        %s670 = smul.addr %s669, 16
        %s671 = scalar_lea.vmem [#allocation10], %s670
        // Predicated region
        $region69: #{tpu_custom_call.1} parent=43 // pred_check
          %p672 = pneg %p219
        $region70: #{tpu_custom_call.1} parent=43 // pred_check_branch
          %674 = sbr.rel (%p672) target = $region72
        $region71: #{tpu_custom_call.1} parent=43 // pred_region
          %s676 = ssub.s32 256, 256
          %677 = vsyncadd %s668, %s676
          %s678 = smul.addr %s27, 2
          %s679 = sadd.s32 %s28, %s678
          %s680 = smul.addr %s679, 128
          %s681 = scalar_lea.hbm %s6, %s680
          %s682 = sshll.u32 %s671, 4
          %s683 = int_to_ptr.vmem [resolvable:$true] %s682
          %688 = dma.vmem_to_hbm [thread:$0]  %s683, 256, %s681, %s668, 128, 128, 8
        $region72: #{tpu_custom_call.1} parent=43 // pred_fallthru
          _
      $region44: #{tpu_custom_call.1} parent=5 // pred_fallthru
        _
      %p689 = scmp.le.s32.totalorder 2, %s17
      // Predicated region
      $region73: #{tpu_custom_call.1} parent=5 // pred_check
        %p690 = pneg %p689
      $region74: #{tpu_custom_call.1} parent=5 // pred_check_branch
        %692 = sbr.rel (%p690) target = $region76
      $region75: #{tpu_custom_call.1} parent=5 // pred_region
        %s693 = ssub.s32 %s17, 2
        // Predicated region
        $region77: #{tpu_custom_call.1} parent=75 // pred_check
          %p694 = pneg %p225
        $region78: #{tpu_custom_call.1} parent=75 // pred_check_branch
          %696 = sbr.rel (%p694) target = $region80
        $region79: #{tpu_custom_call.1} parent=75 // pred_region
          %s697 = sand.u32 %s210, 1
          %s698 = scalar_lea.sflag [#allocation7], %s697
          %s699 = sand.u32 %s210, 1
          %s700 = smul.addr %s699, 16
          %s701 = scalar_lea.vmem [#allocation10], %s700
          %702 = dma.done %s698, 256
        $region80: #{tpu_custom_call.1} parent=75 // pred_fallthru
          _
      $region76: #{tpu_custom_call.1} parent=5 // pred_fallthru
        _
    $region6: #{tpu_custom_call.1} parent=1 // loop_footer
      %s21 = sadd.s32 1, %s17
    $region7: #{tpu_custom_call.1} parent=1 // loop_footer_branch
      %16 = sbr.rel target = $region3
    $region8: #{tpu_custom_call.1} parent=1 // loop_exit
      _
    %703 = vsyncpa [#allocation6], 1
    %s704 = scalar_lea.sflag [#allocation6], 1
    %705 = vsyncpa %s704, 1
    %706 = vsyncpa [#allocation9], 1
    %707 = vsyncpa [#allocation7], 1
    %s708 = scalar_lea.sflag [#allocation7], 1
    %709 = vsyncpa %s708, 1

</llo_original>
